<compile_context>
chip_gen: v7x
topology: tpu7x:2x2x1
jax: 0.10.0
libtpu: 0.0.40
codegen_flags: <defaults>
</compile_context>

<pallas_src>
import functools

import jax
import jax.numpy as jnp
from jax.experimental import pallas as pl
from jax.experimental.pallas import tpu as pltpu


def _round_up(x, m):
    return ((x + m - 1) // m) * m


def mlp_kernel(x_ref, w1_ref, b1_ref, w2_ref, b2_ref, w3_ref, b3_ref, o_ref):
    # Cast the streamed f32 x tile to bf16 here (fused into the kernel) rather
    # than as a separate wrapper-side XLA pass over all of x in HBM.
    x = x_ref[...].astype(jnp.bfloat16)
    # fc1 + relu  (bf16 MXU inputs, f32 accumulate, f32 bias/ReLU)
    h1 = jnp.dot(x, w1_ref[...], preferred_element_type=jnp.float32)
    h1 = jnp.maximum(h1 + b1_ref[...], 0.0)
    # dropout1 (p=0.2): identity at inference time
    # fc2 + relu
    h2 = jnp.dot(h1.astype(jnp.bfloat16), w2_ref[...],
                 preferred_element_type=jnp.float32)
    h2 = jnp.maximum(h2 + b2_ref[...], 0.0)
    # dropout2 (p=0.2): identity at inference time
    # fc3 (out_features=1): VPU multiply + XLU lane reduction instead of an MXU
    # pass that would use 1/128 (or 1/256) of the array. Kept in f32 (v5e VPU
    # has no bf16).
    out = jnp.sum(h2 * w3_ref[...], axis=-1, keepdims=True) + b3_ref[0, 0]
    # TODO(synk): output last dim is 1 -> masked vst.msk stores; a lane-dense
    # (Bp//128, 128) output slab would be marginally better but the absolute
    # bytes here are tiny.
    o_ref[...] = out


def prepare_params(params):
    """One-time parameter layout/dtype prep (hoisted out of the hot path)."""
    w1, b1, w2, b2, w3, b3 = params
    return (
        w1.astype(jnp.bfloat16),                     # (D, 128)  MXU weight
        b1.reshape(1, -1).astype(jnp.float32),       # (1, 128)
        w2.astype(jnp.bfloat16),                     # (128, 64) MXU weight
        b2.reshape(1, -1).astype(jnp.float32),       # (1, 64)
        w3.reshape(1, -1).astype(jnp.float32),       # (1, 64)   VPU row
        b3.reshape(1, 1).astype(jnp.float32),        # scalar -> SMEM
    )


@functools.partial(jax.jit, static_argnames=("tb",))
def net_forward(x, prepared_params, *, tb=8192):
    """x: (B, input_dim) float32. prepared_params from prepare_params().

    Returns (B, 1) float32.
    """
    w1, b1, w2, b2, w3_row, b3_s = prepared_params
    B, D = x.shape
    H1 = w1.shape[1]   # 128
    H2 = w2.shape[1]   # 64
    O = 1

    # --- batch tiling --------------------------------------------------------
    # Large TB amortizes per-grid-step overhead; cap so that (a) large batches
    # produce >= 2 tiles (both TensorCores used on v7x), (b) the f32 x tile,
    # f32 h1/h2 intermediates and double-buffers stay far under the 32 MiB
    # default scoped VMEM on every generation (TB=8192: ~20 MiB peak).
    TB = min(tb, _round_up(pl.cdiv(B, 2), 8), _round_up(B, 8))
    TB = max(TB, 8)
    grid = (pl.cdiv(B, TB),)   # ragged final block: OOB reads unused rows,
                               # OOB output rows are masked on write.

    const2 = lambda shape: pl.BlockSpec(shape, lambda i: (0, 0))  # noqa: E731

    cost = pl.CostEstimate(
        flops=2 * B * (D * H1 + H1 * H2 + H2 * O),
        transcendentals=0,
        bytes_accessed=(x.size * 4 + B * O * 4
                        + w1.size * 2 + w2.size * 2
                        + (b1.size + b2.size + w3_row.size + 1) * 4),
    )

    out = pl.pallas_call(
        mlp_kernel,
        out_shape=jax.ShapeDtypeStruct((B, O), jnp.float32),
        grid_spec=pltpu.PrefetchScalarGridSpec(
            num_scalar_prefetch=0,
            grid=grid,
            in_specs=[
                pl.BlockSpec((TB, D), lambda i: (i, 0)),   # x: streamed f32 batch tile
                const2((D, H1)),                           # w1 (bf16), VMEM-resident
                const2((1, H1)),                           # b1 (f32)
                const2((H1, H2)),                          # w2 (bf16)
                const2((1, H2)),                           # b2 (f32)
                const2((1, H2)),                           # w3 row (f32)
                pl.BlockSpec(memory_space=pltpu.MemorySpace.SMEM),  # b3 scalar
            ],
            out_specs=pl.BlockSpec((TB, O), lambda i: (i, 0)),
        ),
        compiler_params=pltpu.CompilerParams(
            dimension_semantics=("parallel",),
            vmem_limit_bytes=48 * 1024 * 1024,
        ),
        cost_estimate=cost,
    )(x, w1, b1, w2, b2, w3_row, b3_s)

    return out


def init_params(key, input_dim):
    """Deterministic init mimicking nn.Linear's uniform(-1/sqrt(fan_in), 1/sqrt(fan_in))."""
    def linear(k, fan_in, fan_out):
        kw, kb = jax.random.split(k)
        bound = 1.0 / jnp.sqrt(fan_in)
        w = jax.random.uniform(kw, (fan_in, fan_out), jnp.float32, -bound, bound)
        b = jax.random.uniform(kb, (1, fan_out), jnp.float32, -bound, bound)
        return w, b

    k1, k2, k3 = jax.random.split(key, 3)
    w1, b1 = linear(k1, input_dim, 128)
    w2, b2 = linear(k2, 128, 64)
    w3, b3 = linear(k3, 64, 1)
    return (w1, b1, w2, b2, w3, b3)


def reference_forward(x, params):
    """Pure-f32 JAX reference matching the PyTorch module (dropout = identity)."""
    w1, b1, w2, b2, w3, b3 = params
    h1 = jnp.maximum(x @ w1 + b1, 0.0)
    h2 = jnp.maximum(h1 @ w2 + b2, 0.0)
    return h2 @ w3 + b3


if __name__ == "__main__":
    B, input_dim = 8, 32
    key = jax.random.PRNGKey(0)
    kx, kp = jax.random.split(key)
    x = jax.random.normal(kx, (B, input_dim), jnp.float32)
    params = init_params(kp, input_dim)

    prepared = prepare_params(params)          # one-time weight cast/reshape
    out = net_forward(x, prepared)
    out = jax.block_until_ready(out)

    ref = reference_forward(x, params)
    assert out.shape == (B, 1)
    # bf16 MXU inputs with f32 accumulation: compare to the f32 reference with
    # a tolerance covering bf16 input rounding.
    assert jnp.allclose(out, ref, atol=5e-2, rtol=1e-2), (
        f"max abs err {jnp.max(jnp.abs(out - ref))}")
    print("KERNEL_OK")
</pallas_src>

<mosaic_0001>
module attributes {stable_mosaic.version = 11 : i64} {
  func.func @mlp_kernel(%arg0: i32, %arg1: memref<8x32xf32, #tpu.memory_space<vmem>>, %arg2: memref<32x128xbf16, #tpu.memory_space<vmem>>, %arg3: memref<1x128xf32, #tpu.memory_space<vmem>>, %arg4: memref<128x64xbf16, #tpu.memory_space<vmem>>, %arg5: memref<1x64xf32, #tpu.memory_space<vmem>>, %arg6: memref<1x64xf32, #tpu.memory_space<vmem>>, %arg7: memref<1x1xf32, #tpu.memory_space<smem>>, %arg8: memref<8x1xf32, #tpu.memory_space<vmem>>) attributes {dimension_semantics = [#tpu.dimension_semantics<parallel>], iteration_bounds = array<i64: 1>, scalar_prefetch = 0 : i64, scratch_operands = 0 : i64, tpu.core_type = #tpu.core_type<tc>, window_params = [{transform_indices = @transform_0, window_bounds = array<i64: 8, 32>}, {pipeline_mode = #tpu.pipeline_mode<synchronous>, transform_indices = @transform_1, window_bounds = array<i64: 32, 128>}, {pipeline_mode = #tpu.pipeline_mode<synchronous>, transform_indices = @transform_2, window_bounds = array<i64: 1, 128>}, {pipeline_mode = #tpu.pipeline_mode<synchronous>, transform_indices = @transform_3, window_bounds = array<i64: 128, 64>}, {pipeline_mode = #tpu.pipeline_mode<synchronous>, transform_indices = @transform_4, window_bounds = array<i64: 1, 64>}, {pipeline_mode = #tpu.pipeline_mode<synchronous>, transform_indices = @transform_5, window_bounds = array<i64: 1, 64>}, {transform_indices = @transform_6, window_bounds = array<i64: 1, 1>}, {transform_indices = @transform_7, window_bounds = array<i64: 8, 1>}]} {
    %c0 = arith.constant 0 : index
    %c0_0 = arith.constant 0 : index
    %0 = vector.load %arg1[%c0, %c0_0] : memref<8x32xf32, #tpu.memory_space<vmem>>, vector<8x32xf32>
    %1 = arith.truncf %0 : vector<8x32xf32> to vector<8x32xbf16>
    %c0_1 = arith.constant 0 : index
    %c0_2 = arith.constant 0 : index
    %2 = vector.load %arg2[%c0_1, %c0_2] : memref<32x128xbf16, #tpu.memory_space<vmem>>, vector<32x128xbf16>
    %cst = arith.constant dense<0.000000e+00> : vector<8x128xf32>
    %3 = tpu.matmul %1, %2, %cst {dimension_numbers = #tpu.dot_dimension_numbers<[1], [0], [0], [1], [0, 0, 1, 1], [], []>} : vector<8x32xbf16>, vector<32x128xbf16>, vector<8x128xf32> -> vector<8x128xf32>
    %c0_3 = arith.constant 0 : index
    %c0_4 = arith.constant 0 : index
    %4 = vector.load %arg3[%c0_3, %c0_4] : memref<1x128xf32, #tpu.memory_space<vmem>>, vector<1x128xf32>
    %5 = vector.broadcast %4 : vector<1x128xf32> to vector<8x128xf32>
    %6 = arith.addf %3, %5 : vector<8x128xf32>
    %cst_5 = arith.constant 0.000000e+00 : f32
    %7 = vector.broadcast %cst_5 : f32 to vector<8x128xf32>
    %8 = arith.maximumf %6, %7 : vector<8x128xf32>
    %9 = arith.truncf %8 : vector<8x128xf32> to vector<8x128xbf16>
    %c0_6 = arith.constant 0 : index
    %c0_7 = arith.constant 0 : index
    %10 = vector.load %arg4[%c0_6, %c0_7] : memref<128x64xbf16, #tpu.memory_space<vmem>>, vector<128x64xbf16>
    %cst_8 = arith.constant dense<0.000000e+00> : vector<8x64xf32>
    %11 = tpu.matmul %9, %10, %cst_8 {dimension_numbers = #tpu.dot_dimension_numbers<[1], [0], [0], [1], [0, 0, 1, 1], [], []>} : vector<8x128xbf16>, vector<128x64xbf16>, vector<8x64xf32> -> vector<8x64xf32>
    %c0_9 = arith.constant 0 : index
    %c0_10 = arith.constant 0 : index
    %12 = vector.load %arg5[%c0_9, %c0_10] : memref<1x64xf32, #tpu.memory_space<vmem>>, vector<1x64xf32>
    %13 = vector.broadcast %12 : vector<1x64xf32> to vector<8x64xf32>
    %14 = arith.addf %11, %13 : vector<8x64xf32>
    %cst_11 = arith.constant 0.000000e+00 : f32
    %15 = vector.broadcast %cst_11 : f32 to vector<8x64xf32>
    %16 = arith.maximumf %14, %15 : vector<8x64xf32>
    %c0_12 = arith.constant 0 : index
    %c0_13 = arith.constant 0 : index
    %17 = vector.load %arg6[%c0_12, %c0_13] : memref<1x64xf32, #tpu.memory_space<vmem>>, vector<1x64xf32>
    %18 = vector.broadcast %17 : vector<1x64xf32> to vector<8x64xf32>
    %19 = arith.mulf %16, %18 : vector<8x64xf32>
    %cst_14 = arith.constant dense<0.000000e+00> : vector<8xf32>
    %20 = vector.multi_reduction <add>, %19, %cst_14 [1] : vector<8x64xf32> to vector<8xf32>
    %21 = vector.shape_cast %20 : vector<8xf32> to vector<8x1xf32>
    %c0_15 = arith.constant 0 : index
    %c0_16 = arith.constant 0 : index
    %22 = memref.load %arg7[%c0_15, %c0_16] : memref<1x1xf32, #tpu.memory_space<smem>>
    %23 = vector.broadcast %22 : f32 to vector<8x1xf32>
    %24 = arith.addf %21, %23 : vector<8x1xf32>
    %c0_17 = arith.constant 0 : index
    %c0_18 = arith.constant 0 : index
    %25 = vector.load %arg8[%c0_17, %c0_18] : memref<8x1xf32, #tpu.memory_space<vmem>>, vector<8x1xf32>
    tpu.vector_store %arg8[%c0_17, %c0_18], %24 {strides = array<i32>} : memref<8x1xf32, #tpu.memory_space<vmem>>, vector<8x1xf32>,
    return
  }
  func.func @transform_0(%arg0: i32) -> (i32, i32) {
    %c0_i32 = arith.constant 0 : i32
    %c0_i32_0 = arith.constant 0 : i32
    return %arg0, %c0_i32 : i32, i32
  }
  func.func @transform_1(%arg0: i32) -> (i32, i32) {
    %c0_i32 = arith.constant 0 : i32
    %c0_i32_0 = arith.constant 0 : i32
    %c0_i32_1 = arith.constant 0 : i32
    return %c0_i32, %c0_i32_0 : i32, i32
  }
  func.func @transform_2(%arg0: i32) -> (i32, i32) {
    %c0_i32 = arith.constant 0 : i32
    %c0_i32_0 = arith.constant 0 : i32
    %c0_i32_1 = arith.constant 0 : i32
    return %c0_i32, %c0_i32_0 : i32, i32
  }
  func.func @transform_3(%arg0: i32) -> (i32, i32) {
    %c0_i32 = arith.constant 0 : i32
    %c0_i32_0 = arith.constant 0 : i32
    %c0_i32_1 = arith.constant 0 : i32
    return %c0_i32, %c0_i32_0 : i32, i32
  }
  func.func @transform_4(%arg0: i32) -> (i32, i32) {
    %c0_i32 = arith.constant 0 : i32
    %c0_i32_0 = arith.constant 0 : i32
    %c0_i32_1 = arith.constant 0 : i32
    return %c0_i32, %c0_i32_0 : i32, i32
  }
  func.func @transform_5(%arg0: i32) -> (i32, i32) {
    %c0_i32 = arith.constant 0 : i32
    %c0_i32_0 = arith.constant 0 : i32
    %c0_i32_1 = arith.constant 0 : i32
    return %c0_i32, %c0_i32_0 : i32, i32
  }
  func.func @transform_6(%arg0: i32) -> (i32, i32) {
    %c0_i32 = arith.constant 0 : i32
    %c0_i32_0 = arith.constant 0 : i32
    %c0_i32_1 = arith.constant 0 : i32
    return %c0_i32, %c0_i32_0 : i32, i32
  }
  func.func @transform_7(%arg0: i32) -> (i32, i32) {
    %c0_i32 = arith.constant 0 : i32
    %c0_i32_0 = arith.constant 0 : i32
    return %arg0, %c0_i32 : i32, i32
  }
}

</mosaic_0001>

<llo_original>
// kernel: net_forward.1
$region0: #{net_forward.1}
  #allocation0 [shape = 'u32[]', space=smem, size = 0x4, offset = 0x4, fixed_abs, tag = 'smem constant byte address 0x4 - core index']
  #allocation1 [shape = 'u32[144,128]{1,0:T(1,128)}', space=vmem, size = 0x12000, scoped, tag = 'internal scratch']
  #allocation2 [shape = 'f32[1,1]{1,0:T(1,128)S(6)}', space=smem, size = 0x200, scoped, tag = 'scoped memory for net_forward.1']
  %s0 = inlined_call_operand.vmem [shape: f32[8,32], index: 0, kind: input, shape index: {}]
  %s1 = inlined_call_operand.vmem [shape: bf16[32,128], index: 1, kind: input, shape index: {}]
  %s2 = inlined_call_operand.vmem [shape: f32[1,128], index: 2, kind: input, shape index: {}]
  %s3 = inlined_call_operand.vmem [shape: bf16[128,64], index: 3, kind: input, shape index: {}]
  %s4 = inlined_call_operand.vmem [shape: f32[1,64], index: 4, kind: input, shape index: {}]
  %s5 = inlined_call_operand.vmem [shape: f32[1,64], index: 5, kind: input, shape index: {}]
  %s6 = inlined_call_operand.<no memory space> [shape: f32[1,1], index: 6, kind: input, shape index: {}]
  %s7 = inlined_call_operand.vmem [shape: f32[8,1], index: 7, kind: output, shape index: {}]
  %s8 = sld [smem:[#allocation0]]
  $region38: #{net_forward.1} parent=0
    _
  %s10 = ssub.s32 1, %s8
  %s11 = scalar_select 0, %s10, %s8
  %12 = sst [smem:[#allocation2]] %s6
  // Predicated region
  $region2: #{net_forward.1} parent=0 // pred_check
    _
  $region3: #{net_forward.1} parent=0 // pred_check_branch
    %14 = sbr.rel (0) target = $region5
  $region4: #{net_forward.1} parent=0 // pred_region
    _
  $region5: #{net_forward.1} parent=0 // pred_fallthru
    _
  // Predicated region
  $region6: #{net_forward.1} parent=0 // pred_check
    _
  $region7: #{net_forward.1} parent=0 // pred_check_branch
    %16 = sbr.rel (0) target = $region9
  $region8: #{net_forward.1} parent=0 // pred_region
    _
  $region9: #{net_forward.1} parent=0 // pred_fallthru
    _
  // Predicated region
  $region10: #{net_forward.1} parent=0 // pred_check
    _
  $region11: #{net_forward.1} parent=0 // pred_check_branch
    %18 = sbr.rel (0) target = $region13
  $region12: #{net_forward.1} parent=0 // pred_region
    _
  $region13: #{net_forward.1} parent=0 // pred_fallthru
    _
  // Predicated region
  $region14: #{net_forward.1} parent=0 // pred_check
    _
  $region15: #{net_forward.1} parent=0 // pred_check_branch
    %20 = sbr.rel (0) target = $region17
  $region16: #{net_forward.1} parent=0 // pred_region
    _
  $region17: #{net_forward.1} parent=0 // pred_fallthru
    _
  // Predicated region
  $region18: #{net_forward.1} parent=0 // pred_check
    _
  $region19: #{net_forward.1} parent=0 // pred_check_branch
    %22 = sbr.rel (0) target = $region21
  $region20: #{net_forward.1} parent=0 // pred_region
    _
  $region21: #{net_forward.1} parent=0 // pred_fallthru
    _
  // Predicated region
  $region22: #{net_forward.1} parent=0 // pred_check
    _
  $region23: #{net_forward.1} parent=0 // pred_check_branch
    %24 = sbr.rel (0) target = $region25
  $region24: #{net_forward.1} parent=0 // pred_region
    _
  $region25: #{net_forward.1} parent=0 // pred_fallthru
    _
  // Predicated region
  $region26: #{net_forward.1} parent=0 // pred_check
    _
  $region27: #{net_forward.1} parent=0 // pred_check_branch
    %26 = sbr.rel (0) target = $region29
  $region28: #{net_forward.1} parent=0 // pred_region
    _
  $region29: #{net_forward.1} parent=0 // pred_fallthru
    _
  %v28 = vld [vmem:[%s0] sm:$0xff]
  %v29 = vpack.c.bf16 %v28, %v28
  %v30 = vld [vmem:[%s1] sm:$0xf]
  %v31 = vld [vmem:[%s1 + $0x4] sm:$0xf]
  %v32 = vld [vmem:[%s1 + $0x8] sm:$0xf]
  %v33 = vld [vmem:[%s1 + $0xc] sm:$0xf]
  %v34 = vld [vmem:[%s2] sm:$0x1]
  %v36 = vlaneseq
  %v37 = vshrl.u32 %v36, 7
  %v38 = vsub.s32 0, %v37
  %v39 = vrot.slane %v34, %v38
  %v45 = vunpack.c.l.b16 %v30
  %v46 = vunpack.c.l.b16 %v31
  %v47 = vunpack.c.l.b16 %v32
  %v48 = vunpack.c.l.b16 %v33
  %v49 = vpack.c.b16 %v46, %v45
  %v50 = vpack.c.b16 %v48, %v47
  %vm53 = vcmask 261120
  %v55 = vsel %vm53, %v29, 0
  %57 = vmatprep.subr.bf16.mxu0 0
  %58 = vmatpush1.bf16.msra.mxu0 %v49
  %59 = vmatprep.subr.bf16.mxu0 0
  %60 = vmatpush1.bf16.msra.mxu0 %v50
  %61 = vmatprep.subr.bf16.mxu0 0
  %62 = vmatpush1.bf16.msra.mxu0 0
  %63 = vmatprep.subr.bf16.mxu0 0
  %64 = vmatpush1.bf16.msra.mxu0 0
  %65 = vmatprep.subr.bf16.mxu0 0
  %66 = vmatpush1.bf16.msra.mxu0 0
  %67 = vmatprep.subr.bf16.mxu0 0
  %68 = vmatpush1.bf16.msra.mxu0 0
  %69 = vmatprep.subr.bf16.mxu0 0
  %70 = vmatpush1.bf16.msra.mxu0 0
  %71 = vmatprep.subr.bf16.mxu0 0
  %72 = vmatpush1.bf16.msra.mxu0 0
  %73 = vmatprep.subr.bf16.mxu0 0
  %74 = vmatpush1.bf16.msra.mxu0 0
  %75 = vmatprep.subr.bf16.mxu0 0
  %76 = vmatpush1.bf16.msra.mxu0 0
  %77 = vmatprep.subr.bf16.mxu0 0
  %78 = vmatpush1.bf16.msra.mxu0 0
  %79 = vmatprep.subr.bf16.mxu0 0
  %80 = vmatpush1.bf16.msra.mxu0 0
  %81 = vmatprep.subr.bf16.mxu0 0
  %82 = vmatpush1.bf16.msra.mxu0 0
  %83 = vmatprep.subr.bf16.mxu0 0
  %84 = vmatpush1.bf16.msra.mxu0 0
  %85 = vmatprep.subr.bf16.mxu0 0
  %86 = vmatpush1.bf16.msra.mxu0 0
  %87 = vmatprep.subr.bf16.mxu0 0
  %88 = vmatpush1.bf16.msra.mxu0 0
  %89 = vmatprep.mubr.bf16.mxu0 0
  %90 = vmatmul.mubr.bf16.gmra.mrb[0].mxu0 %v55
  %v91 = vpop.f32.mrb[0].mxu0
  %v92 = vadd.f32 %v39, %v91
  %v93 = vpop.f32.mrb[0].mxu0
  %v94 = vpop.f32.mrb[0].mxu0
  %v95 = vpop.f32.mrb[0].mxu0
  %96 = vdwg.mxu0
  %v97 = vmax.f32 %v92, 0.0
  %v98 = vpack.c.bf16 %v97, %v97
  %v99 = vld [vmem:[%s3] sm:$0xf]
  %v100 = vld [vmem:[%s3 + $0x4] sm:$0xf]
  %v101 = vld [vmem:[%s3 + $0x8] sm:$0xf]
  %v102 = vld [vmem:[%s3 + $0xc] sm:$0xf]
  %v103 = vld [vmem:[%s3 + $0x10] sm:$0xf]
  %v104 = vld [vmem:[%s3 + $0x14] sm:$0xf]
  %v105 = vld [vmem:[%s3 + $0x18] sm:$0xf]
  %v106 = vld [vmem:[%s3 + $0x1c] sm:$0xf]
  %v107 = vld [vmem:[%s3 + $0x20] sm:$0xf]
  %v108 = vld [vmem:[%s3 + $0x24] sm:$0xf]
  %v109 = vld [vmem:[%s3 + $0x28] sm:$0xf]
  %v110 = vld [vmem:[%s3 + $0x2c] sm:$0xf]
  %v111 = vld [vmem:[%s3 + $0x30] sm:$0xf]
  %v112 = vld [vmem:[%s3 + $0x34] sm:$0xf]
  %v113 = vld [vmem:[%s3 + $0x38] sm:$0xf]
  %v114 = vld [vmem:[%s3 + $0x3c] sm:$0xf]
  %v115 = vld [vmem:[%s4] sm:$0x1]
  %v117 = vlaneseq
  %v118 = vshrl.u32 %v117, 7
  %v119 = vsub.s32 0, %v118
  %v120 = vrot.slane %v115, %v119
  %v138 = vunpack.c.l.b16 %v99
  %v139 = vunpack.c.l.b16 %v100
  %v140 = vunpack.c.l.b16 %v101
  %v141 = vunpack.c.l.b16 %v102
  %v142 = vunpack.c.l.b16 %v103
  %v143 = vunpack.c.l.b16 %v104
  %v144 = vunpack.c.l.b16 %v105
  %v145 = vunpack.c.l.b16 %v106
  %v146 = vunpack.c.l.b16 %v107
  %v147 = vunpack.c.l.b16 %v108
  %v148 = vunpack.c.l.b16 %v109
  %v149 = vunpack.c.l.b16 %v110
  %v150 = vunpack.c.l.b16 %v111
  %v151 = vunpack.c.l.b16 %v112
  %v152 = vunpack.c.l.b16 %v113
  %v153 = vunpack.c.l.b16 %v114
  %v154 = vpack.c.b16 %v139, %v138
  %v155 = vpack.c.b16 %v141, %v140
  %v156 = vpack.c.b16 %v143, %v142
  %v157 = vpack.c.b16 %v145, %v144
  %v158 = vpack.c.b16 %v147, %v146
  %v159 = vpack.c.b16 %v149, %v148
  %v160 = vpack.c.b16 %v151, %v150
  %v161 = vpack.c.b16 %v153, %v152
  %170 = vmatprep.subr.bf16.mxu0 0
  %171 = vmatpush1.bf16.msra.mxu0 %v154
  %172 = vmatprep.subr.bf16.mxu0 0
  %173 = vmatpush1.bf16.msra.mxu0 %v155
  %174 = vmatprep.subr.bf16.mxu0 0
  %175 = vmatpush1.bf16.msra.mxu0 %v156
  %176 = vmatprep.subr.bf16.mxu0 0
  %177 = vmatpush1.bf16.msra.mxu0 %v157
  %178 = vmatprep.subr.bf16.mxu0 0
  %179 = vmatpush1.bf16.msra.mxu0 %v158
  %180 = vmatprep.subr.bf16.mxu0 0
  %181 = vmatpush1.bf16.msra.mxu0 %v159
  %182 = vmatprep.subr.bf16.mxu0 0
  %183 = vmatpush1.bf16.msra.mxu0 %v160
  %184 = vmatprep.subr.bf16.mxu0 0
  %185 = vmatpush1.bf16.msra.mxu0 %v161
  %186 = vmatprep.subr.bf16.mxu0 0
  %187 = vmatpush1.bf16.msra.mxu0 0
  %188 = vmatprep.subr.bf16.mxu0 0
  %189 = vmatpush1.bf16.msra.mxu0 0
  %190 = vmatprep.subr.bf16.mxu0 0
  %191 = vmatpush1.bf16.msra.mxu0 0
  %192 = vmatprep.subr.bf16.mxu0 0
  %193 = vmatpush1.bf16.msra.mxu0 0
  %194 = vmatprep.subr.bf16.mxu0 0
  %195 = vmatpush1.bf16.msra.mxu0 0
  %196 = vmatprep.subr.bf16.mxu0 0
  %197 = vmatpush1.bf16.msra.mxu0 0
  %198 = vmatprep.subr.bf16.mxu0 0
  %199 = vmatpush1.bf16.msra.mxu0 0
  %200 = vmatprep.subr.bf16.mxu0 0
  %201 = vmatpush1.bf16.msra.mxu0 0
  %202 = vmatprep.mubr.bf16.mxu0 0
  %203 = vmatmul.mubr.bf16.gmra.mrb[0].mxu0 %v98
  %v204 = vpop.f32.mrb[0].mxu0
  %v205 = vadd.f32 %v120, %v204
  %v206 = vpop.f32.mrb[0].mxu0
  %v207 = vpop.f32.mrb[0].mxu0
  %v208 = vpop.f32.mrb[0].mxu0
  %209 = vdwg.mxu0
  %v210 = vmax.f32 %v205, 0.0
  %v211 = vld [vmem:[%s5] sm:$0x1]
  %v213 = vlaneseq
  %v214 = vshrl.u32 %v213, 7
  %v215 = vsub.s32 0, %v214
  %v216 = vrot.slane %v211, %v215
  %v218 = vmul.f32 %v210, %v216
  %vm219 = vcmask 523264
  %v220 = vsel %vm219, %v218, 0.0
  %221 = vadd.xlane.f32.xlu0 %v220
  %v222 = vpop.xlane.xlu0 %221
  %s223 = sld [smem:[#allocation2]]
  %v224 = vstv %s223
  %v225 = vadd.f32 %v222, %v224
  %vm226 = vcmask 7168
  %227 = vst.msk [vmem:[%s7] sm:$0xff] %vm226, %v225
  // Predicated region
  $region30: #{net_forward.1} parent=0 // pred_check
    _
  $region31: #{net_forward.1} parent=0 // pred_check_branch
    %229 = sbr.rel (0) target = $region33
  $region32: #{net_forward.1} parent=0 // pred_region
    _
  $region33: #{net_forward.1} parent=0 // pred_fallthru
    _
  // Predicated region
  $region34: #{net_forward.1} parent=0 // pred_check
    _
  $region35: #{net_forward.1} parent=0 // pred_check_branch
    %231 = sbr.rel (0) target = $region37
  $region36: #{net_forward.1} parent=0 // pred_region
    _
  $region37: #{net_forward.1} parent=0 // pred_fallthru
    _

</llo_original>
